<compile_context>
chip_gen: v7x
topology: tpu7x:2x2x1
jax: 0.10.0
libtpu: 0.0.40
codegen_flags: <defaults>
</compile_context>

<pallas_src>
import math

import jax
import jax.numpy as jnp
from jax.experimental import pallas as pl
from jax.experimental.pallas import tpu as pltpu

LANE = 128


def _round_up(x, m):
    return (x + m - 1) // m * m


def dqn_forward_kernel(x_ref, w1_ref, b1_ref, w2_ref, b2_ref, w3_ref, b3_ref,
                       out_ref):
    """One batch tile of: relu(relu(x@W1+b1)@W2+b2)@W3+b3 (lane-padded out)."""
    x = x_ref[...].astype(jnp.bfloat16)

    h1 = jnp.dot(x, w1_ref[...], preferred_element_type=jnp.float32)
    h1 = jnp.maximum(h1 + b1_ref[...], 0.0)                       # ReLU(fc1), f32

    h2 = jnp.dot(h1.astype(jnp.bfloat16), w2_ref[...],
                 preferred_element_type=jnp.float32)
    h2 = jnp.maximum(h2 + b2_ref[...], 0.0)                       # ReLU(fc2), f32

    out = jnp.dot(h2.astype(jnp.bfloat16), w3_ref[...],
                  preferred_element_type=jnp.float32)
    out_ref[...] = (out + b3_ref[...]).astype(out_ref.dtype)      # fc3 + bias


def prepare_params(params):
    """One-time conversion from PyTorch layout -> kernel layout.

    PyTorch: w (out, in) f32, b (out,) f32.
    Kernel : w (in, out) bf16 (last layer lane-padded to 128),
             b (1, out) f32  (last layer lane-padded to 128).
    """
    w1 = jnp.asarray(params["w1"]).T.astype(jnp.bfloat16)          # (in,  fc1)
    w2 = jnp.asarray(params["w2"]).T.astype(jnp.bfloat16)          # (fc1, fc2)
    w3 = jnp.asarray(params["w3"], jnp.float32).T                  # (fc2, n_act)
    b1 = jnp.asarray(params["b1"], jnp.float32).reshape(1, -1)
    b2 = jnp.asarray(params["b2"], jnp.float32).reshape(1, -1)
    b3 = jnp.asarray(params["b3"], jnp.float32).reshape(1, -1)

    n_actions = w3.shape[1]
    n_pad = _round_up(n_actions, LANE)
    if n_pad != n_actions:
        w3 = jnp.pad(w3, ((0, 0), (0, n_pad - n_actions)))
        b3 = jnp.pad(b3, ((0, 0), (0, n_pad - n_actions)))
    w3 = w3.astype(jnp.bfloat16)

    kp = {"w1": w1, "b1": b1, "w2": w2, "b2": b2, "w3": w3, "b3": b3}
    return kp, n_actions


def dqn_forward(state, kp, n_actions, *, tile_b=256):
    """state: (B, input_dim) f32. kp: prepared kernel params."""
    state = jnp.asarray(state, jnp.float32)
    batch, in_dim = state.shape
    fc1 = kp["w1"].shape[1]
    fc2 = kp["w2"].shape[1]
    n_pad = kp["w3"].shape[1]

    # Batch tile: multiple of 8 sublanes, capped at tile_b; pad batch to a
    # whole number of tiles (padded rows are sliced away at the end).
    tb = min(tile_b, _round_up(batch, 8))
    pb = _round_up(batch, tb)
    if pb != batch:
        state = jnp.pad(state, ((0, pb - batch), (0, 0)))
    grid = (pb // tb,)

    def resident(shape):
        # Same block index every grid step -> weights/biases stay in VMEM.
        return pl.BlockSpec(shape, lambda i: (0, 0))

    flops = 2 * pb * (in_dim * fc1 + fc1 * fc2 + fc2 * n_pad)
    bytes_accessed = (
        pb * in_dim * 4 + pb * n_pad * 4                         # state + out
        + (in_dim * fc1 + fc1 * fc2 + fc2 * n_pad) * 2           # bf16 weights
        + (fc1 + fc2 + n_pad) * 4)                               # f32 biases

    out_padded = pl.pallas_call(
        dqn_forward_kernel,
        out_shape=jax.ShapeDtypeStruct((pb, n_pad), jnp.float32),
        grid=grid,
        in_specs=[
            pl.BlockSpec((tb, in_dim), lambda i: (i, 0)),        # state tile
            resident((in_dim, fc1)),                             # W1
            resident((1, fc1)),                                  # b1
            resident((fc1, fc2)),                                # W2
            resident((1, fc2)),                                  # b2
            resident((fc2, n_pad)),                              # W3 (padded)
            resident((1, n_pad)),                                # b3 (padded)
        ],
        out_specs=pl.BlockSpec((tb, n_pad), lambda i: (i, 0)),
        compiler_params=pltpu.CompilerParams(
            dimension_semantics=("parallel",),
            vmem_limit_bytes=64 * 1024 * 1024,
        ),
        cost_estimate=pl.CostEstimate(
            flops=flops, transcendentals=0, bytes_accessed=bytes_accessed),
    )(state, kp["w1"], kp["b1"], kp["w2"], kp["b2"], kp["w3"], kp["b3"])

    return out_padded[:batch, :n_actions]


def init_linear_params(key, in_features, out_features):
    """Deterministic init matching nn.Linear's default (uniform +-1/sqrt(in))."""
    kw, kb = jax.random.split(key)
    bound = 1.0 / math.sqrt(in_features)
    w = jax.random.uniform(kw, (out_features, in_features), jnp.float32,
                           minval=-bound, maxval=bound)
    b = jax.random.uniform(kb, (out_features,), jnp.float32,
                           minval=-bound, maxval=bound)
    return w, b


def reference_forward(state, params):
    """Plain-JAX f32 reference mirroring the PyTorch forward."""
    h1 = jax.nn.relu(state @ params["w1"].T + params["b1"])
    h2 = jax.nn.relu(h1 @ params["w2"].T + params["b2"])
    return h2 @ params["w3"].T + params["b3"]


if __name__ == "__main__":
    # Shapes consistent with DeepQNetwork(lr, input_dims=(16,), fc1_dims=32,
    # fc2_dims=32, n_actions=8, Q_value=...).
    batch = 8
    input_dim = 16
    fc1_dims = 32
    fc2_dims = 32
    n_actions = 8

    root = jax.random.PRNGKey(0)
    k_x, k1, k2, k3 = jax.random.split(root, 4)

    w1, b1 = init_linear_params(k1, input_dim, fc1_dims)
    w2, b2 = init_linear_params(k2, fc1_dims, fc2_dims)
    w3, b3 = init_linear_params(k3, fc2_dims, n_actions)
    params = {"w1": w1, "b1": b1, "w2": w2, "b2": b2, "w3": w3, "b3": b3}

    # One-time layout conversion (no per-call transposes / padding).
    kparams, n_act = prepare_params(params)

    state = jax.random.normal(k_x, (batch, input_dim), jnp.float32)

    actions = dqn_forward(state, kparams, n_act)
    actions = jax.block_until_ready(actions)

    # Correctness vs the f32 reference (bf16 MXU inputs -> loosened tolerance).
    expected = reference_forward(state, params)
    assert actions.shape == (batch, n_actions)
    assert jnp.allclose(actions, expected, atol=2e-2, rtol=2e-2), (
        float(jnp.max(jnp.abs(actions - expected))))

    print("KERNEL_OK")
</pallas_src>

<mosaic_0001>
module attributes {stable_mosaic.version = 11 : i64} {
  func.func @dqn_forward_kernel(%arg0: i32, %arg1: memref<8x16xf32, #tpu.memory_space<vmem>>, %arg2: memref<16x32xbf16, #tpu.memory_space<vmem>>, %arg3: memref<1x32xf32, #tpu.memory_space<vmem>>, %arg4: memref<32x32xbf16, #tpu.memory_space<vmem>>, %arg5: memref<1x32xf32, #tpu.memory_space<vmem>>, %arg6: memref<32x128xbf16, #tpu.memory_space<vmem>>, %arg7: memref<1x128xf32, #tpu.memory_space<vmem>>, %arg8: memref<8x128xf32, #tpu.memory_space<vmem>>) attributes {dimension_semantics = [#tpu.dimension_semantics<parallel>], iteration_bounds = array<i64: 1>, scalar_prefetch = 0 : i64, scratch_operands = 0 : i64, tpu.core_type = #tpu.core_type<tc>, window_params = [{transform_indices = @transform_0, window_bounds = array<i64: 8, 16>}, {pipeline_mode = #tpu.pipeline_mode<synchronous>, transform_indices = @transform_1, window_bounds = array<i64: 16, 32>}, {pipeline_mode = #tpu.pipeline_mode<synchronous>, transform_indices = @transform_2, window_bounds = array<i64: 1, 32>}, {pipeline_mode = #tpu.pipeline_mode<synchronous>, transform_indices = @transform_3, window_bounds = array<i64: 32, 32>}, {pipeline_mode = #tpu.pipeline_mode<synchronous>, transform_indices = @transform_4, window_bounds = array<i64: 1, 32>}, {pipeline_mode = #tpu.pipeline_mode<synchronous>, transform_indices = @transform_5, window_bounds = array<i64: 32, 128>}, {pipeline_mode = #tpu.pipeline_mode<synchronous>, transform_indices = @transform_6, window_bounds = array<i64: 1, 128>}, {transform_indices = @transform_7, window_bounds = array<i64: 8, 128>}]} {
    %c0 = arith.constant 0 : index
    %c0_0 = arith.constant 0 : index
    %0 = vector.load %arg1[%c0, %c0_0] : memref<8x16xf32, #tpu.memory_space<vmem>>, vector<8x16xf32>
    %1 = arith.truncf %0 : vector<8x16xf32> to vector<8x16xbf16>
    %c0_1 = arith.constant 0 : index
    %c0_2 = arith.constant 0 : index
    %2 = vector.load %arg2[%c0_1, %c0_2] : memref<16x32xbf16, #tpu.memory_space<vmem>>, vector<16x32xbf16>
    %cst = arith.constant dense<0.000000e+00> : vector<8x32xf32>
    %3 = tpu.matmul %1, %2, %cst {dimension_numbers = #tpu.dot_dimension_numbers<[1], [0], [0], [1], [0, 0, 1, 1], [], []>} : vector<8x16xbf16>, vector<16x32xbf16>, vector<8x32xf32> -> vector<8x32xf32>
    %c0_3 = arith.constant 0 : index
    %c0_4 = arith.constant 0 : index
    %4 = vector.load %arg3[%c0_3, %c0_4] : memref<1x32xf32, #tpu.memory_space<vmem>>, vector<1x32xf32>
    %5 = vector.broadcast %4 : vector<1x32xf32> to vector<8x32xf32>
    %6 = arith.addf %3, %5 : vector<8x32xf32>
    %cst_5 = arith.constant 0.000000e+00 : f32
    %7 = vector.broadcast %cst_5 : f32 to vector<8x32xf32>
    %8 = arith.maximumf %6, %7 : vector<8x32xf32>
    %9 = arith.truncf %8 : vector<8x32xf32> to vector<8x32xbf16>
    %c0_6 = arith.constant 0 : index
    %c0_7 = arith.constant 0 : index
    %10 = vector.load %arg4[%c0_6, %c0_7] : memref<32x32xbf16, #tpu.memory_space<vmem>>, vector<32x32xbf16>
    %cst_8 = arith.constant dense<0.000000e+00> : vector<8x32xf32>
    %11 = tpu.matmul %9, %10, %cst_8 {dimension_numbers = #tpu.dot_dimension_numbers<[1], [0], [0], [1], [0, 0, 1, 1], [], []>} : vector<8x32xbf16>, vector<32x32xbf16>, vector<8x32xf32> -> vector<8x32xf32>
    %c0_9 = arith.constant 0 : index
    %c0_10 = arith.constant 0 : index
    %12 = vector.load %arg5[%c0_9, %c0_10] : memref<1x32xf32, #tpu.memory_space<vmem>>, vector<1x32xf32>
    %13 = vector.broadcast %12 : vector<1x32xf32> to vector<8x32xf32>
    %14 = arith.addf %11, %13 : vector<8x32xf32>
    %cst_11 = arith.constant 0.000000e+00 : f32
    %15 = vector.broadcast %cst_11 : f32 to vector<8x32xf32>
    %16 = arith.maximumf %14, %15 : vector<8x32xf32>
    %17 = arith.truncf %16 : vector<8x32xf32> to vector<8x32xbf16>
    %c0_12 = arith.constant 0 : index
    %c0_13 = arith.constant 0 : index
    %18 = vector.load %arg6[%c0_12, %c0_13] : memref<32x128xbf16, #tpu.memory_space<vmem>>, vector<32x128xbf16>
    %cst_14 = arith.constant dense<0.000000e+00> : vector<8x128xf32>
    %19 = tpu.matmul %17, %18, %cst_14 {dimension_numbers = #tpu.dot_dimension_numbers<[1], [0], [0], [1], [0, 0, 1, 1], [], []>} : vector<8x32xbf16>, vector<32x128xbf16>, vector<8x128xf32> -> vector<8x128xf32>
    %c0_15 = arith.constant 0 : index
    %c0_16 = arith.constant 0 : index
    %20 = vector.load %arg7[%c0_15, %c0_16] : memref<1x128xf32, #tpu.memory_space<vmem>>, vector<1x128xf32>
    %21 = vector.broadcast %20 : vector<1x128xf32> to vector<8x128xf32>
    %22 = arith.addf %19, %21 : vector<8x128xf32>
    %c0_17 = arith.constant 0 : index
    %c0_18 = arith.constant 0 : index
    %23 = vector.load %arg8[%c0_17, %c0_18] : memref<8x128xf32, #tpu.memory_space<vmem>>, vector<8x128xf32>
    tpu.vector_store %arg8[%c0_17, %c0_18], %22 {strides = array<i32>} : memref<8x128xf32, #tpu.memory_space<vmem>>, vector<8x128xf32>,
    return
  }
  func.func @transform_0(%arg0: i32) -> (i32, i32) {
    %c0_i32 = arith.constant 0 : i32
    %c0_i32_0 = arith.constant 0 : i32
    return %arg0, %c0_i32 : i32, i32
  }
  func.func @transform_1(%arg0: i32) -> (i32, i32) {
    %c0_i32 = arith.constant 0 : i32
    %c0_i32_0 = arith.constant 0 : i32
    %c0_i32_1 = arith.constant 0 : i32
    return %c0_i32, %c0_i32_0 : i32, i32
  }
  func.func @transform_2(%arg0: i32) -> (i32, i32) {
    %c0_i32 = arith.constant 0 : i32
    %c0_i32_0 = arith.constant 0 : i32
    %c0_i32_1 = arith.constant 0 : i32
    return %c0_i32, %c0_i32_0 : i32, i32
  }
  func.func @transform_3(%arg0: i32) -> (i32, i32) {
    %c0_i32 = arith.constant 0 : i32
    %c0_i32_0 = arith.constant 0 : i32
    %c0_i32_1 = arith.constant 0 : i32
    return %c0_i32, %c0_i32_0 : i32, i32
  }
  func.func @transform_4(%arg0: i32) -> (i32, i32) {
    %c0_i32 = arith.constant 0 : i32
    %c0_i32_0 = arith.constant 0 : i32
    %c0_i32_1 = arith.constant 0 : i32
    return %c0_i32, %c0_i32_0 : i32, i32
  }
  func.func @transform_5(%arg0: i32) -> (i32, i32) {
    %c0_i32 = arith.constant 0 : i32
    %c0_i32_0 = arith.constant 0 : i32
    %c0_i32_1 = arith.constant 0 : i32
    return %c0_i32, %c0_i32_0 : i32, i32
  }
  func.func @transform_6(%arg0: i32) -> (i32, i32) {
    %c0_i32 = arith.constant 0 : i32
    %c0_i32_0 = arith.constant 0 : i32
    %c0_i32_1 = arith.constant 0 : i32
    return %c0_i32, %c0_i32_0 : i32, i32
  }
  func.func @transform_7(%arg0: i32) -> (i32, i32) {
    %c0_i32 = arith.constant 0 : i32
    %c0_i32_0 = arith.constant 0 : i32
    return %arg0, %c0_i32 : i32, i32
  }
}

</mosaic_0001>

<llo_original>
// kernel: tpu_custom_call.1
$region0: #{tpu_custom_call.1}
  #allocation0 [shape = 'u32[]', space=smem, size = 0x4, offset = 0x4, fixed_abs, tag = 'smem constant byte address 0x4 - core index']
  #allocation1 [shape = 'u32[144,128]{1,0:T(1,128)}', space=vmem, size = 0x12000, scoped, tag = 'internal scratch']
  %s0 = inlined_call_operand.hbm [shape: f32[8,16], index: 0, kind: input, shape index: {}]
  %s1 = inlined_call_operand.hbm [shape: bf16[16,32], index: 1, kind: input, shape index: {}]
  %s2 = inlined_call_operand.hbm [shape: f32[1,32], index: 2, kind: input, shape index: {}]
  %s3 = inlined_call_operand.hbm [shape: bf16[32,32], index: 3, kind: input, shape index: {}]
  %s4 = inlined_call_operand.hbm [shape: f32[1,32], index: 4, kind: input, shape index: {}]
  %s5 = inlined_call_operand.hbm [shape: bf16[32,128], index: 5, kind: input, shape index: {}]
  %s6 = inlined_call_operand.hbm [shape: f32[1,128], index: 6, kind: input, shape index: {}]
  %s7 = inlined_call_operand.hbm [shape: f32[8,128], index: 7, kind: output, shape index: {}]
  %s8 = sld [smem:[#allocation0]]
  $region66: #{tpu_custom_call.1} parent=0
    _
  %s10 = ssub.s32 1, %s8
  %s11 = scalar_select 0, %s10, %s8
  $region1: #{tpu_custom_call.1} parent=0
    #allocation2 [shape = 'u8[4096]{0}', space=vmem, size = 0x1000, scoped, tag = 'input window, operand 0, single buffered']
    #allocation3 [shape = 's32[1]{0}', space=sflag, size = 0x4, scoped, tag = 'scoped memory for tpu_custom_call.1']
    #allocation4 [shape = 's32[1]{0}', space=sflag, size = 0x4, scoped, tag = 'scoped memory for tpu_custom_call.1']
    #allocation5 [shape = 'u8[4096]{0}', space=vmem, size = 0x1000, scoped, tag = 'input window, operand 1, single buffered']
    #allocation6 [shape = 's32[1]{0}', space=sflag, size = 0x4, scoped, tag = 'scoped memory for tpu_custom_call.1']
    #allocation7 [shape = 'u8[512]{0}', space=vmem, size = 0x400, scoped, tag = 'input window, operand 2, single buffered']
    #allocation8 [shape = 'u8[8192]{0}', space=vmem, size = 0x2000, scoped, tag = 'input window, operand 3, single buffered']
    #allocation9 [shape = 's32[1]{0}', space=sflag, size = 0x4, scoped, tag = 'scoped memory for tpu_custom_call.1']
    #allocation10 [shape = 'u8[512]{0}', space=vmem, size = 0x400, scoped, tag = 'input window, operand 4, single buffered']
    #allocation11 [shape = 'u8[8192]{0}', space=vmem, size = 0x2000, scoped, tag = 'input window, operand 5, single buffered']
    #allocation12 [shape = 's32[1]{0}', space=sflag, size = 0x4, scoped, tag = 'scoped memory for tpu_custom_call.1']
    #allocation13 [shape = 'u8[512]{0}', space=vmem, size = 0x400, scoped, tag = 'input window, operand 6, single buffered']
    #allocation14 [shape = 'u8[4096]{0}', space=vmem, size = 0x1000, scoped, tag = 'output window, operand 0, single buffered']
    %12 = vsyncpa [#allocation3], 0
    %13 = vsyncpa [#allocation6], 0
    %14 = vsyncpa [#allocation9], 0
    %15 = vsyncpa [#allocation12], 0
    %16 = vsyncpa [#allocation4], 0
    // Predicated region
    $region2: #{tpu_custom_call.1} parent=1 // pred_check
      _
    $region3: #{tpu_custom_call.1} parent=1 // pred_check_branch
      %18 = sbr.rel (0) target = $region5
    $region4: #{tpu_custom_call.1} parent=1 // pred_region
      %s20 = ssub.s32 128, 128
      %21 = vsyncadd [#allocation3], %s20
      %s23 = sshll.u32 [#allocation2], 4
      %s24 = int_to_ptr.vmem [resolvable:$true] %s23
      %26 = dma.hbm_to_vmem [thread:$0]  %s0, 128, %s24, [#allocation3]
    $region5: #{tpu_custom_call.1} parent=1 // pred_fallthru
      _
    // Predicated region
    $region6: #{tpu_custom_call.1} parent=1 // pred_check
      _
    $region7: #{tpu_custom_call.1} parent=1 // pred_check_branch
      %28 = sbr.rel (0) target = $region9
    $region8: #{tpu_custom_call.1} parent=1 // pred_region
      %s30 = ssub.s32 128, 128
      %31 = vsyncadd [#allocation6], %s30
      %s32 = sshll.u32 [#allocation5], 4
      %s33 = int_to_ptr.vmem [resolvable:$true] %s32
      %38 = dma.hbm_to_vmem [thread:$0]  %s1, 128, %s33, [#allocation6], 64, 64, 4
    $region9: #{tpu_custom_call.1} parent=1 // pred_fallthru
      _
    // Predicated region
    $region10: #{tpu_custom_call.1} parent=1 // pred_check
      _
    $region11: #{tpu_custom_call.1} parent=1 // pred_check_branch
      %40 = sbr.rel (0) target = $region13
    $region12: #{tpu_custom_call.1} parent=1 // pred_region
      %s42 = ssub.s32 16, 16
      %43 = vsyncadd [#allocation6], %s42
      %s45 = sshll.u32 [#allocation7], 4
      %s46 = int_to_ptr.vmem [resolvable:$true] %s45
      %48 = dma.hbm_to_vmem [thread:$0]  %s2, 16, %s46, [#allocation6]
    $region13: #{tpu_custom_call.1} parent=1 // pred_fallthru
      _
    // Predicated region
    $region14: #{tpu_custom_call.1} parent=1 // pred_check
      _
    $region15: #{tpu_custom_call.1} parent=1 // pred_check_branch
      %50 = sbr.rel (0) target = $region17
    $region16: #{tpu_custom_call.1} parent=1 // pred_region
      %s52 = ssub.s32 256, 256
      %53 = vsyncadd [#allocation9], %s52
      %s54 = sshll.u32 [#allocation8], 4
      %s55 = int_to_ptr.vmem [resolvable:$true] %s54
      %60 = dma.hbm_to_vmem [thread:$0]  %s3, 256, %s55, [#allocation9], 64, 64, 4
    $region17: #{tpu_custom_call.1} parent=1 // pred_fallthru
      _
    // Predicated region
    $region18: #{tpu_custom_call.1} parent=1 // pred_check
      _
    $region19: #{tpu_custom_call.1} parent=1 // pred_check_branch
      %62 = sbr.rel (0) target = $region21
    $region20: #{tpu_custom_call.1} parent=1 // pred_region
      %s64 = ssub.s32 16, 16
      %65 = vsyncadd [#allocation9], %s64
      %s67 = sshll.u32 [#allocation10], 4
      %s68 = int_to_ptr.vmem [resolvable:$true] %s67
      %70 = dma.hbm_to_vmem [thread:$0]  %s4, 16, %s68, [#allocation9]
    $region21: #{tpu_custom_call.1} parent=1 // pred_fallthru
      _
    // Predicated region
    $region22: #{tpu_custom_call.1} parent=1 // pred_check
      _
    $region23: #{tpu_custom_call.1} parent=1 // pred_check_branch
      %72 = sbr.rel (0) target = $region25
    $region24: #{tpu_custom_call.1} parent=1 // pred_region
      %s74 = ssub.s32 256, 256
      %75 = vsyncadd [#allocation12], %s74
      %s76 = sshll.u32 [#allocation11], 4
      %s77 = int_to_ptr.vmem [resolvable:$true] %s76
      %82 = dma.hbm_to_vmem [thread:$0]  %s5, 256, %s77, [#allocation12], 64, 64, 4
    $region25: #{tpu_custom_call.1} parent=1 // pred_fallthru
      _
    // Predicated region
    $region26: #{tpu_custom_call.1} parent=1 // pred_check
      _
    $region27: #{tpu_custom_call.1} parent=1 // pred_check_branch
      %84 = sbr.rel (0) target = $region29
    $region28: #{tpu_custom_call.1} parent=1 // pred_region
      %s86 = ssub.s32 16, 16
      %87 = vsyncadd [#allocation12], %s86
      %s89 = sshll.u32 [#allocation13], 4
      %s90 = int_to_ptr.vmem [resolvable:$true] %s89
      %92 = dma.hbm_to_vmem [thread:$0]  %s6, 16, %s90, [#allocation12]
    $region29: #{tpu_custom_call.1} parent=1 // pred_fallthru
      _
    // Predicated region
    $region30: #{tpu_custom_call.1} parent=1 // pred_check
      _
    $region31: #{tpu_custom_call.1} parent=1 // pred_check_branch
      %94 = sbr.rel (0) target = $region33
    $region32: #{tpu_custom_call.1} parent=1 // pred_region
      %95 = dma.done [#allocation3], 128
    $region33: #{tpu_custom_call.1} parent=1 // pred_fallthru
      _
    // Predicated region
    $region34: #{tpu_custom_call.1} parent=1 // pred_check
      _
    $region35: #{tpu_custom_call.1} parent=1 // pred_check_branch
      %97 = sbr.rel (0) target = $region37
    $region36: #{tpu_custom_call.1} parent=1 // pred_region
      %98 = dma.done [#allocation6], 128
    $region37: #{tpu_custom_call.1} parent=1 // pred_fallthru
      _
    // Predicated region
    $region38: #{tpu_custom_call.1} parent=1 // pred_check
      _
    $region39: #{tpu_custom_call.1} parent=1 // pred_check_branch
      %100 = sbr.rel (0) target = $region41
    $region40: #{tpu_custom_call.1} parent=1 // pred_region
      %101 = dma.done [#allocation6], 16
    $region41: #{tpu_custom_call.1} parent=1 // pred_fallthru
      _
    // Predicated region
    $region42: #{tpu_custom_call.1} parent=1 // pred_check
      _
    $region43: #{tpu_custom_call.1} parent=1 // pred_check_branch
      %103 = sbr.rel (0) target = $region45
    $region44: #{tpu_custom_call.1} parent=1 // pred_region
      %104 = dma.done [#allocation9], 256
    $region45: #{tpu_custom_call.1} parent=1 // pred_fallthru
      _
    // Predicated region
    $region46: #{tpu_custom_call.1} parent=1 // pred_check
      _
    $region47: #{tpu_custom_call.1} parent=1 // pred_check_branch
      %106 = sbr.rel (0) target = $region49
    $region48: #{tpu_custom_call.1} parent=1 // pred_region
      %107 = dma.done [#allocation9], 16
    $region49: #{tpu_custom_call.1} parent=1 // pred_fallthru
      _
    // Predicated region
    $region50: #{tpu_custom_call.1} parent=1 // pred_check
      _
    $region51: #{tpu_custom_call.1} parent=1 // pred_check_branch
      %109 = sbr.rel (0) target = $region53
    $region52: #{tpu_custom_call.1} parent=1 // pred_region
      %110 = dma.done [#allocation12], 256
    $region53: #{tpu_custom_call.1} parent=1 // pred_fallthru
      _
    // Predicated region
    $region54: #{tpu_custom_call.1} parent=1 // pred_check
      _
    $region55: #{tpu_custom_call.1} parent=1 // pred_check_branch
      %112 = sbr.rel (0) target = $region57
    $region56: #{tpu_custom_call.1} parent=1 // pred_region
      %113 = dma.done [#allocation12], 16
    $region57: #{tpu_custom_call.1} parent=1 // pred_fallthru
      _
    %v115 = vld [vmem:[#allocation2] sm:$0xff]
    %v116 = vpack.c.bf16 %v115, %v115
    %v117 = vld [vmem:[#allocation5] sm:$0xf]
    %v118 = vld [vmem:[#allocation5 + $0x4] sm:$0xf]
    %v119 = vld [vmem:[#allocation7] sm:$0x1]
    %v121 = vlaneseq
    %v122 = vshrl.u32 %v121, 7
    %v123 = vsub.s32 0, %v122
    %v124 = vrot.slane %v119, %v123
    %v128 = vunpack.c.l.b16 %v117
    %v129 = vunpack.c.l.b16 %v118
    %v130 = vpack.c.b16 %v129, %v128
    %vm132 = vcmask 130048
    %v134 = vsel %vm132, %v116, 0
    %136 = vmatprep.subr.bf16.mxu0 0
    %137 = vmatpush1.bf16.msra.mxu0 %v130
    %138 = vmatprep.subr.bf16.mxu0 0
    %139 = vmatpush1.bf16.msra.mxu0 0
    %140 = vmatprep.subr.bf16.mxu0 0
    %141 = vmatpush1.bf16.msra.mxu0 0
    %142 = vmatprep.subr.bf16.mxu0 0
    %143 = vmatpush1.bf16.msra.mxu0 0
    %144 = vmatprep.subr.bf16.mxu0 0
    %145 = vmatpush1.bf16.msra.mxu0 0
    %146 = vmatprep.subr.bf16.mxu0 0
    %147 = vmatpush1.bf16.msra.mxu0 0
    %148 = vmatprep.subr.bf16.mxu0 0
    %149 = vmatpush1.bf16.msra.mxu0 0
    %150 = vmatprep.subr.bf16.mxu0 0
    %151 = vmatpush1.bf16.msra.mxu0 0
    %152 = vmatprep.subr.bf16.mxu0 0
    %153 = vmatpush1.bf16.msra.mxu0 0
    %154 = vmatprep.subr.bf16.mxu0 0
    %155 = vmatpush1.bf16.msra.mxu0 0
    %156 = vmatprep.subr.bf16.mxu0 0
    %157 = vmatpush1.bf16.msra.mxu0 0
    %158 = vmatprep.subr.bf16.mxu0 0
    %159 = vmatpush1.bf16.msra.mxu0 0
    %160 = vmatprep.subr.bf16.mxu0 0
    %161 = vmatpush1.bf16.msra.mxu0 0
    %162 = vmatprep.subr.bf16.mxu0 0
    %163 = vmatpush1.bf16.msra.mxu0 0
    %164 = vmatprep.subr.bf16.mxu0 0
    %165 = vmatpush1.bf16.msra.mxu0 0
    %166 = vmatprep.subr.bf16.mxu0 0
    %167 = vmatpush1.bf16.msra.mxu0 0
    %168 = vmatprep.mubr.bf16.mxu0 0
    %169 = vmatmul.mubr.bf16.gmra.mrb[0].mxu0 %v134
    %v170 = vpop.f32.mrb[0].mxu0
    %v171 = vadd.f32 %v124, %v170
    %v172 = vpop.f32.mrb[0].mxu0
    %v173 = vpop.f32.mrb[0].mxu0
    %v174 = vpop.f32.mrb[0].mxu0
    %175 = vdwg.mxu0
    %v176 = vmax.f32 %v171, 0.0
    %v177 = vpack.c.bf16 %v176, %v176
    %v178 = vld [vmem:[#allocation8] sm:$0xf]
    %v179 = vld [vmem:[#allocation8 + $0x4] sm:$0xf]
    %v180 = vld [vmem:[#allocation8 + $0x8] sm:$0xf]
    %v181 = vld [vmem:[#allocation8 + $0xc] sm:$0xf]
    %v182 = vld [vmem:[#allocation10] sm:$0x1]
    %v184 = vlaneseq
    %v185 = vshrl.u32 %v184, 7
    %v186 = vsub.s32 0, %v185
    %v187 = vrot.slane %v182, %v186
    %v193 = vunpack.c.l.b16 %v178
    %v194 = vunpack.c.l.b16 %v179
    %v195 = vunpack.c.l.b16 %v180
    %v196 = vunpack.c.l.b16 %v181
    %v197 = vpack.c.b16 %v194, %v193
    %v198 = vpack.c.b16 %v196, %v195
    %vm201 = vcmask 261120
    %v203 = vsel %vm201, %v177, 0
    %205 = vmatprep.subr.bf16.mxu0 0
    %206 = vmatpush1.bf16.msra.mxu0 %v197
    %207 = vmatprep.subr.bf16.mxu0 0
    %208 = vmatpush1.bf16.msra.mxu0 %v198
    %209 = vmatprep.subr.bf16.mxu0 0
    %210 = vmatpush1.bf16.msra.mxu0 0
    %211 = vmatprep.subr.bf16.mxu0 0
    %212 = vmatpush1.bf16.msra.mxu0 0
    %213 = vmatprep.subr.bf16.mxu0 0
    %214 = vmatpush1.bf16.msra.mxu0 0
    %215 = vmatprep.subr.bf16.mxu0 0
    %216 = vmatpush1.bf16.msra.mxu0 0
    %217 = vmatprep.subr.bf16.mxu0 0
    %218 = vmatpush1.bf16.msra.mxu0 0
    %219 = vmatprep.subr.bf16.mxu0 0
    %220 = vmatpush1.bf16.msra.mxu0 0
    %221 = vmatprep.subr.bf16.mxu0 0
    %222 = vmatpush1.bf16.msra.mxu0 0
    %223 = vmatprep.subr.bf16.mxu0 0
    %224 = vmatpush1.bf16.msra.mxu0 0
    %225 = vmatprep.subr.bf16.mxu0 0
    %226 = vmatpush1.bf16.msra.mxu0 0
    %227 = vmatprep.subr.bf16.mxu0 0
    %228 = vmatpush1.bf16.msra.mxu0 0
    %229 = vmatprep.subr.bf16.mxu0 0
    %230 = vmatpush1.bf16.msra.mxu0 0
    %231 = vmatprep.subr.bf16.mxu0 0
    %232 = vmatpush1.bf16.msra.mxu0 0
    %233 = vmatprep.subr.bf16.mxu0 0
    %234 = vmatpush1.bf16.msra.mxu0 0
    %235 = vmatprep.subr.bf16.mxu0 0
    %236 = vmatpush1.bf16.msra.mxu0 0
    %237 = vmatprep.mubr.bf16.mxu0 0
    %238 = vmatmul.mubr.bf16.gmra.mrb[0].mxu0 %v203
    %v239 = vpop.f32.mrb[0].mxu0
    %v240 = vadd.f32 %v187, %v239
    %v241 = vpop.f32.mrb[0].mxu0
    %v242 = vpop.f32.mrb[0].mxu0
    %v243 = vpop.f32.mrb[0].mxu0
    %244 = vdwg.mxu0
    %v245 = vmax.f32 %v240, 0.0
    %v246 = vpack.c.bf16 %v245, %v245
    %v247 = vld [vmem:[#allocation11] sm:$0xf]
    %v248 = vld [vmem:[#allocation11 + $0x4] sm:$0xf]
    %v249 = vld [vmem:[#allocation11 + $0x8] sm:$0xf]
    %v250 = vld [vmem:[#allocation11 + $0xc] sm:$0xf]
    %v251 = vld [vmem:[#allocation13] sm:$0x1]
    %v253 = vlaneseq
    %v254 = vshrl.u32 %v253, 7
    %v255 = vsub.s32 0, %v254
    %v256 = vrot.slane %v251, %v255
    %v262 = vunpack.c.l.b16 %v247
    %v263 = vunpack.c.l.b16 %v248
    %v264 = vunpack.c.l.b16 %v249
    %v265 = vunpack.c.l.b16 %v250
    %v266 = vpack.c.b16 %v263, %v262
    %v267 = vpack.c.b16 %v265, %v264
    %v271 = vsel %vm201, %v246, 0
    %273 = vmatprep.subr.bf16.mxu0 0
    %274 = vmatpush1.bf16.msra.mxu0 %v266
    %275 = vmatprep.subr.bf16.mxu0 0
    %276 = vmatpush1.bf16.msra.mxu0 %v267
    %277 = vmatprep.subr.bf16.mxu0 0
    %278 = vmatpush1.bf16.msra.mxu0 0
    %279 = vmatprep.subr.bf16.mxu0 0
    %280 = vmatpush1.bf16.msra.mxu0 0
    %281 = vmatprep.subr.bf16.mxu0 0
    %282 = vmatpush1.bf16.msra.mxu0 0
    %283 = vmatprep.subr.bf16.mxu0 0
    %284 = vmatpush1.bf16.msra.mxu0 0
    %285 = vmatprep.subr.bf16.mxu0 0
    %286 = vmatpush1.bf16.msra.mxu0 0
    %287 = vmatprep.subr.bf16.mxu0 0
    %288 = vmatpush1.bf16.msra.mxu0 0
    %289 = vmatprep.subr.bf16.mxu0 0
    %290 = vmatpush1.bf16.msra.mxu0 0
    %291 = vmatprep.subr.bf16.mxu0 0
    %292 = vmatpush1.bf16.msra.mxu0 0
    %293 = vmatprep.subr.bf16.mxu0 0
    %294 = vmatpush1.bf16.msra.mxu0 0
    %295 = vmatprep.subr.bf16.mxu0 0
    %296 = vmatpush1.bf16.msra.mxu0 0
    %297 = vmatprep.subr.bf16.mxu0 0
    %298 = vmatpush1.bf16.msra.mxu0 0
    %299 = vmatprep.subr.bf16.mxu0 0
    %300 = vmatpush1.bf16.msra.mxu0 0
    %301 = vmatprep.subr.bf16.mxu0 0
    %302 = vmatpush1.bf16.msra.mxu0 0
    %303 = vmatprep.subr.bf16.mxu0 0
    %304 = vmatpush1.bf16.msra.mxu0 0
    %305 = vmatprep.mubr.bf16.mxu0 0
    %306 = vmatmul.mubr.bf16.gmra.mrb[0].mxu0 %v271
    %v307 = vpop.f32.mrb[0].mxu0
    %v308 = vadd.f32 %v256, %v307
    %v309 = vpop.f32.mrb[0].mxu0
    %v310 = vpop.f32.mrb[0].mxu0
    %v311 = vpop.f32.mrb[0].mxu0
    %312 = vdwg.mxu0
    %313 = vst [vmem:[#allocation14] sm:$0xff] %v308
    // Predicated region
    $region58: #{tpu_custom_call.1} parent=1 // pred_check
      _
    $region59: #{tpu_custom_call.1} parent=1 // pred_check_branch
      %315 = sbr.rel (0) target = $region61
    $region60: #{tpu_custom_call.1} parent=1 // pred_region
      %s317 = ssub.s32 128, 128
      %318 = vsyncadd [#allocation4], %s317
      %s320 = sshll.u32 [#allocation14], 4
      %s321 = int_to_ptr.vmem [resolvable:$true] %s320
      %323 = dma.vmem_to_hbm [thread:$0]  %s321, 128, %s7, [#allocation4]
    $region61: #{tpu_custom_call.1} parent=1 // pred_fallthru
      _
    // Predicated region
    $region62: #{tpu_custom_call.1} parent=1 // pred_check
      _
    $region63: #{tpu_custom_call.1} parent=1 // pred_check_branch
      %325 = sbr.rel (0) target = $region65
    $region64: #{tpu_custom_call.1} parent=1 // pred_region
      %326 = dma.done [#allocation4], 128
    $region65: #{tpu_custom_call.1} parent=1 // pred_fallthru
      _
    %327 = vsyncpa [#allocation3], 1
    %328 = vsyncpa [#allocation6], 1
    %329 = vsyncpa [#allocation9], 1
    %330 = vsyncpa [#allocation12], 1
    %331 = vsyncpa [#allocation4], 1

</llo_original>
